<compile_context>
chip_gen: v6e
topology: v6e:2x2x1
jax: 0.10.0
libtpu: 0.0.40
codegen_flags: <defaults>
</compile_context>

<pallas_src>
import functools

import jax
import jax.numpy as jnp
from jax.experimental import pallas as pl
from jax.experimental.pallas import tpu as pltpu


def _round_up(n: int, m: int) -> int:
    return ((n + m - 1) // m) * m


def _box_decoder_kernel(x_ref, w_ref, b_ref, o_ref):
    # (tm, F) @ (F, BOX) -> (tm, BOX), f32 accumulation on the MXU.
    y = jnp.dot(x_ref[...], w_ref[...], preferred_element_type=jnp.float32)
    # Bias add + tanh in f32 (VPU/EUP; safe on v5e), cast to output dtype.
    y = jnp.tanh(y + b_ref[...])
    o_ref[...] = y.astype(o_ref.dtype)


@functools.partial(jax.jit, static_argnames=("block_b",))
def box_decoder(x, w, b, *, block_b: int = 4096):
    """BoxDecoder forward: tanh(x @ w + b).

    Args:
      x: (B, feature_size) activations (f32 or bf16).
      w: (feature_size, box_size) weight (PyTorch Linear weight transposed).
      b: (box_size,) bias.
      block_b: maximum batch tile size.
    Returns:
      (B, box_size) array, same dtype as x.
    """
    B, F = x.shape
    BOX = w.shape[1]
    assert w.shape == (F, BOX)
    assert b.shape == (BOX,)

    # Bias is tiny: keep it f32 and lane-shaped (1, BOX); no other host copies.
    b2 = b.astype(jnp.float32).reshape(1, BOX)

    itemsize = jnp.dtype(x.dtype).itemsize
    # Sublane tile for the batch (second-to-last) dim: 8 f32 / 16 bf16 / 32 i8.
    sub = 8 if itemsize >= 4 else (16 if itemsize == 2 else 32)

    if B <= sub:
        # Full-extent block is always legal regardless of divisibility.
        tm = B
    else:
        tm = min(block_b, _round_up(B, sub))
        # Keep >= 2 grid steps so v7x's two TensorCores both engage.
        tm = min(tm, max(sub, _round_up(pl.cdiv(B, 2), sub)))
        # VMEM budget: double-buffered x/out blocks + f32 matmul temp. Stay
        # well under v5e's ~16 MiB scoped default (v7x 32 MiB / 64 MiB phys).
        per_row = 2 * itemsize * (F + BOX) + 4 * BOX + 16
        max_tm = max(sub, ((8 * 1024 * 1024) // per_row) // sub * sub)
        tm = min(tm, max_tm)

    grid = (pl.cdiv(B, tm),)

    w_bytes = F * BOX * jnp.dtype(w.dtype).itemsize
    cost = pl.CostEstimate(
        flops=2 * B * F * BOX,
        transcendentals=B * BOX,
        bytes_accessed=(B * F + B * BOX) * itemsize + w_bytes + 4 * BOX,
    )

    return pl.pallas_call(
        _box_decoder_kernel,
        out_shape=jax.ShapeDtypeStruct((B, BOX), x.dtype),
        grid_spec=pl.GridSpec(
            grid=grid,
            in_specs=[
                # x streams over the batch grid axis; full feature width.
                pl.BlockSpec((tm, F), lambda i: (i, 0)),
                # Weight and bias stay VMEM-resident for every grid step.
                pl.BlockSpec((F, BOX), lambda i: (0, 0)),
                pl.BlockSpec((1, BOX), lambda i: (0, 0)),
            ],
            out_specs=pl.BlockSpec((tm, BOX), lambda i: (i, 0)),
        ),
        compiler_params=pltpu.CompilerParams(
            dimension_semantics=("parallel",)),
        cost_estimate=cost,
    )(x, w, b2)


def _reference(x, w, b):
    return jnp.tanh(x.astype(jnp.float32) @ w.astype(jnp.float32)
                    + b.astype(jnp.float32)).astype(x.dtype)


if __name__ == "__main__":
    # Small shapes consistent with the module: feature_size=32, box_size=12.
    FEATURE, BOX = 32, 12
    key = jax.random.PRNGKey(0)
    kx, kw, kb, kx2 = jax.random.split(key, 4)

    # PyTorch Linear weight is (out, in); we store the transpose (in, out).
    w = jax.random.normal(kw, (FEATURE, BOX), dtype=jnp.float32) * 0.1
    b = jax.random.normal(kb, (BOX,), dtype=jnp.float32) * 0.1

    # Case 1: tiny batch (single full-extent block).
    x = jax.random.normal(kx, (2, FEATURE), dtype=jnp.float32)
    out = box_decoder(x, w, b)
    jax.block_until_ready(out)
    assert out.shape == (2, BOX)
    assert jnp.allclose(out, _reference(x, w, b), atol=1e-5, rtol=1e-5)

    # Case 2: batch not a multiple of the tile (exercises masked last block
    # and the >=2-grid-step path).
    x2 = jax.random.normal(kx2, (20, FEATURE), dtype=jnp.float32)
    out2 = box_decoder(x2, w, b)
    jax.block_until_ready(out2)
    assert out2.shape == (20, BOX)
    assert jnp.allclose(out2, _reference(x2, w, b), atol=1e-5, rtol=1e-5)

    print("KERNEL_OK")
</pallas_src>

<mosaic_0001>
module attributes {stable_mosaic.version = 11 : i64} {
  func.func @_box_decoder_kernel(%arg0: i32, %arg1: memref<2x32xf32, #tpu.memory_space<vmem>>, %arg2: memref<32x12xf32, #tpu.memory_space<vmem>>, %arg3: memref<1x12xf32, #tpu.memory_space<vmem>>, %arg4: memref<2x12xf32, #tpu.memory_space<vmem>>) attributes {dimension_semantics = [#tpu.dimension_semantics<parallel>], iteration_bounds = array<i64: 1>, scalar_prefetch = 0 : i64, scratch_operands = 0 : i64, tpu.core_type = #tpu.core_type<tc>, window_params = [{transform_indices = @transform_0, window_bounds = array<i64: 2, 32>}, {pipeline_mode = #tpu.pipeline_mode<synchronous>, transform_indices = @transform_1, window_bounds = array<i64: 32, 12>}, {pipeline_mode = #tpu.pipeline_mode<synchronous>, transform_indices = @transform_2, window_bounds = array<i64: 1, 12>}, {transform_indices = @transform_3, window_bounds = array<i64: 2, 12>}]} {
    %c0 = arith.constant 0 : index
    %c0_0 = arith.constant 0 : index
    %0 = vector.load %arg1[%c0, %c0_0] : memref<2x32xf32, #tpu.memory_space<vmem>>, vector<2x32xf32>
    %c0_1 = arith.constant 0 : index
    %c0_2 = arith.constant 0 : index
    %1 = vector.load %arg2[%c0_1, %c0_2] : memref<32x12xf32, #tpu.memory_space<vmem>>, vector<32x12xf32>
    %cst = arith.constant dense<0.000000e+00> : vector<2x12xf32>
    %2 = tpu.matmul %0, %1, %cst {dimension_numbers = #tpu.dot_dimension_numbers<[1], [0], [0], [1], [0, 0, 1, 1], [], []>} : vector<2x32xf32>, vector<32x12xf32>, vector<2x12xf32> -> vector<2x12xf32>
    %c0_3 = arith.constant 0 : index
    %c0_4 = arith.constant 0 : index
    %3 = vector.load %arg3[%c0_3, %c0_4] : memref<1x12xf32, #tpu.memory_space<vmem>>, vector<1x12xf32>
    %4 = vector.broadcast %3 : vector<1x12xf32> to vector<2x12xf32>
    %5 = arith.addf %2, %4 : vector<2x12xf32>
    %6 = math.tanh %5 : vector<2x12xf32>
    %c0_5 = arith.constant 0 : index
    %c0_6 = arith.constant 0 : index
    %7 = vector.load %arg4[%c0_5, %c0_6] : memref<2x12xf32, #tpu.memory_space<vmem>>, vector<2x12xf32>
    tpu.vector_store %arg4[%c0_5, %c0_6], %6 {strides = array<i32>} : memref<2x12xf32, #tpu.memory_space<vmem>>, vector<2x12xf32>,
    return
  }
  func.func @transform_0(%arg0: i32) -> (i32, i32) {
    %c0_i32 = arith.constant 0 : i32
    %c0_i32_0 = arith.constant 0 : i32
    return %arg0, %c0_i32 : i32, i32
  }
  func.func @transform_1(%arg0: i32) -> (i32, i32) {
    %c0_i32 = arith.constant 0 : i32
    %c0_i32_0 = arith.constant 0 : i32
    %c0_i32_1 = arith.constant 0 : i32
    return %c0_i32, %c0_i32_0 : i32, i32
  }
  func.func @transform_2(%arg0: i32) -> (i32, i32) {
    %c0_i32 = arith.constant 0 : i32
    %c0_i32_0 = arith.constant 0 : i32
    %c0_i32_1 = arith.constant 0 : i32
    return %c0_i32, %c0_i32_0 : i32, i32
  }
  func.func @transform_3(%arg0: i32) -> (i32, i32) {
    %c0_i32 = arith.constant 0 : i32
    %c0_i32_0 = arith.constant 0 : i32
    return %arg0, %c0_i32 : i32, i32
  }
}

</mosaic_0001>

<llo_original>
// kernel: box_decoder.1
$region0: #{box_decoder.1}
  #allocation0 [shape = 'u32[]', space=smem, size = 0x4, offset = 0x4, fixed_abs, tag = 'smem constant byte address 0x4 - core index']
  #allocation1 [shape = 'u32[144,128]{1,0:T(1,128)}', space=vmem, size = 0x12000, scoped, tag = 'internal scratch']
  %s0 = inlined_call_operand.vmem [shape: f32[2,32], index: 0, kind: input, shape index: {}]
  %s1 = inlined_call_operand.vmem [shape: f32[32,12], index: 1, kind: input, shape index: {}]
  %s2 = inlined_call_operand.vmem [shape: f32[1,12], index: 2, kind: input, shape index: {}]
  %s3 = inlined_call_operand.hbm [shape: f32[2,12], index: 3, kind: output, shape index: {}]
  %s4 = sld [smem:[#allocation0]]
  $region22: #{box_decoder.1} parent=0
    _
  %s6 = ssub.s32 1, %s4
  %s7 = scalar_select 0, %s6, %s4
  $region1: #{box_decoder.1} parent=0
    #allocation2 [shape = 'u8[1024]{0}', space=vmem, size = 0x400, scoped, tag = 'output window, operand 0, single buffered']
    #allocation3 [shape = 's32[1]{0}', space=sflag, size = 0x4, scoped, tag = 'scoped memory for box_decoder.1']
    %8 = vsyncpa [#allocation3], 0
    // Predicated region
    $region2: #{box_decoder.1} parent=1 // pred_check
      _
    $region3: #{box_decoder.1} parent=1 // pred_check_branch
      %10 = sbr.rel (0) target = $region5
    $region4: #{box_decoder.1} parent=1 // pred_region
      _
    $region5: #{box_decoder.1} parent=1 // pred_fallthru
      _
    // Predicated region
    $region6: #{box_decoder.1} parent=1 // pred_check
      _
    $region7: #{box_decoder.1} parent=1 // pred_check_branch
      %12 = sbr.rel (0) target = $region9
    $region8: #{box_decoder.1} parent=1 // pred_region
      _
    $region9: #{box_decoder.1} parent=1 // pred_fallthru
      _
    // Predicated region
    $region10: #{box_decoder.1} parent=1 // pred_check
      _
    $region11: #{box_decoder.1} parent=1 // pred_check_branch
      %14 = sbr.rel (0) target = $region13
    $region12: #{box_decoder.1} parent=1 // pred_region
      _
    $region13: #{box_decoder.1} parent=1 // pred_fallthru
      _
    %v15 = vld [vmem:[%s0] sm:$0x3]
    %v16 = vld [vmem:[%s1] sm:$0xff]
    %v17 = vld [vmem:[%s1 + $0x8] sm:$0xff]
    %v18 = vld [vmem:[%s1 + $0x10] sm:$0xff]
    %v19 = vld [vmem:[%s1 + $0x18] sm:$0xff]
    %v20 = vld [vmem:[%s2] sm:$0x1]
    %v22 = vlaneseq
    %v23 = vshrl.u32 %v22, 7
    %v24 = vsub.s32 0, %v23
    %v25 = vrot.slane %v20, %v24
    %vm27 = vcmask 261120
    %v29 = vsel %vm27, %v15, 0
    %31 = vmatprep.subr.mxu0 0.0
    %32 = vmatpush1.msra.mxu0 0.0
    %33 = vmatprep.subr.mxu0 0.0
    %34 = vmatpush1.msra.mxu0 0.0
    %35 = vmatprep.subr.mxu0 0.0
    %36 = vmatpush1.msra.mxu0 0.0
    %37 = vmatprep.subr.mxu0 0.0
    %38 = vmatpush1.msra.mxu0 0.0
    %39 = vmatprep.subr.mxu0 0.0
    %40 = vmatpush1.msra.mxu0 0.0
    %41 = vmatprep.subr.mxu0 0.0
    %42 = vmatpush1.msra.mxu0 0.0
    %43 = vmatprep.subr.mxu0 0.0
    %44 = vmatpush1.msra.mxu0 0.0
    %45 = vmatprep.subr.mxu0 0.0
    %46 = vmatpush1.msra.mxu0 0.0
    %47 = vmatprep.subr.mxu0 0.0
    %48 = vmatpush1.msra.mxu0 0.0
    %49 = vmatprep.subr.mxu0 0.0
    %50 = vmatpush1.msra.mxu0 0.0
    %51 = vmatprep.subr.mxu0 0.0
    %52 = vmatpush1.msra.mxu0 0.0
    %53 = vmatprep.subr.mxu0 0.0
    %54 = vmatpush1.msra.mxu0 0.0
    %55 = vmatprep.subr.mxu0 0.0
    %56 = vmatpush1.msra.mxu0 %v19
    %57 = vmatprep.subr.mxu0 0.0
    %58 = vmatpush1.msra.mxu0 %v18
    %59 = vmatprep.subr.mxu0 0.0
    %60 = vmatpush1.msra.mxu0 %v17
    %61 = vmatprep.subr.mxu0 0.0
    %62 = vmatpush1.msra.mxu0 %v16
    %63 = vmatprep.subr.mxu0 0.0
    %64 = vmatpush2.msra.mxu0 0.0
    %65 = vmatprep.subr.mxu0 0.0
    %66 = vmatpush2.msra.mxu0 0.0
    %67 = vmatprep.subr.mxu0 0.0
    %68 = vmatpush2.msra.mxu0 0.0
    %69 = vmatprep.subr.mxu0 0.0
    %70 = vmatpush2.msra.mxu0 0.0
    %71 = vmatprep.subr.mxu0 0.0
    %72 = vmatpush2.msra.mxu0 0.0
    %73 = vmatprep.subr.mxu0 0.0
    %74 = vmatpush2.msra.mxu0 0.0
    %75 = vmatprep.subr.mxu0 0.0
    %76 = vmatpush2.msra.mxu0 0.0
    %77 = vmatprep.subr.mxu0 0.0
    %78 = vmatpush2.msra.mxu0 0.0
    %79 = vmatprep.subr.mxu0 0.0
    %80 = vmatpush2.msra.mxu0 0.0
    %81 = vmatprep.subr.mxu0 0.0
    %82 = vmatpush2.msra.mxu0 0.0
    %83 = vmatprep.subr.mxu0 0.0
    %84 = vmatpush2.msra.mxu0 0.0
    %85 = vmatprep.subr.mxu0 0.0
    %86 = vmatpush2.msra.mxu0 0.0
    %87 = vmatprep.subr.mxu0 0.0
    %88 = vmatpush2.msra.mxu0 0.0
    %89 = vmatprep.subr.mxu0 0.0
    %90 = vmatpush2.msra.mxu0 0.0
    %91 = vmatprep.subr.mxu0 0.0
    %92 = vmatpush2.msra.mxu0 0.0
    %93 = vmatprep.subr.mxu0 0.0
    %94 = vmatpush2.msra.mxu0 0.0
    %95 = vmatprep.mubr.f32.mxu0 0.0
    %96 = vmatmul.mubr.f32.gmra.mxu0 %v29
    %v97 = vpop.f32.mrf.mxu0
    %v98 = vadd.f32 %v25, %v97
    %v99 = vpop.f32.mrf.mxu0
    %100 = vdwg.mxu0
    %v101 = vtanh.pop %v98
    %vm102 = vcmask 91136
    %103 = vst.msk [vmem:[#allocation2] sm:$0x3] %vm102, %v101
    // Predicated region
    $region14: #{box_decoder.1} parent=1 // pred_check
      _
    $region15: #{box_decoder.1} parent=1 // pred_check_branch
      %105 = sbr.rel (0) target = $region17
    $region16: #{box_decoder.1} parent=1 // pred_region
      %s107 = ssub.s32 32, 32
      %108 = vsyncadd [#allocation3], %s107
      %s110 = sshll.u32 [#allocation2], 4
      %s111 = int_to_ptr.vmem [resolvable:$true] %s110
      %113 = dma.vmem_to_hbm [thread:$0]  %s111, 32, %s3, [#allocation3]
    $region17: #{box_decoder.1} parent=1 // pred_fallthru
      _
    // Predicated region
    $region18: #{box_decoder.1} parent=1 // pred_check
      _
    $region19: #{box_decoder.1} parent=1 // pred_check_branch
      %115 = sbr.rel (0) target = $region21
    $region20: #{box_decoder.1} parent=1 // pred_region
      %116 = dma.done [#allocation3], 32
    $region21: #{box_decoder.1} parent=1 // pred_fallthru
      _
    %117 = vsyncpa [#allocation3], 1

</llo_original>
